<compile_context>
chip_gen: v5e
topology: v5e:2x2
jax: 0.10.0
libtpu: 0.0.40
codegen_flags: <defaults>
</compile_context>

<pallas_src>
import jax
import jax.numpy as jnp
from jax.experimental import pallas as pl
from jax.experimental.pallas import tpu as pltpu
import numpy as np


_TARGET_X_TILE_BYTES = 8 << 20          # ~8 MiB x tiles: >85% of HBM roofline, long DMA rows
_TRIPLE_BUFFER_MAX_TILE_BYTES = 4 << 20  # deeper buffering only pays off for modest tiles
_MIN_PARALLEL_STEPS = 4                  # keep >=4 N-tiles so v7x megacore has work


def _round_down(x, q):
    return (x // q) * q


def _round_up(x, q):
    return ((x + q - 1) // q) * q


def _vmem_budget_and_limit():
    """Pick a scoped-VMEM limit and an x-stream budget that fit the chip generation."""
    phys = None
    try:
        phys = pltpu.get_tpu_info().vmem_capacity_bytes
    except Exception:
        phys = None
    if phys is not None and phys > (64 << 20):
        limit = 64 << 20      # v5e / v6e: 128 MiB physical VMEM
    else:
        limit = 48 << 20      # v7x-class (64 MiB physical) or unknown: stay conservative
    budget = limit - (16 << 20)  # headroom for w / out buffers and compiler scratch
    return budget, limit


def _pick_tiles(dim, n, budget_bytes):
    """Choose (tile_k, tile_n, n_buffers) for the f32 x stream."""
    bpe = 4
    if n < 128:
        lane_q = None
        min_tile_n = n
    else:
        lane_q = 256 if n >= 256 else 128   # 256-wide MXU passes on v6e/v7x
        min_tile_n = lane_q

    if 2 * dim * min_tile_n * bpe <= budget_bytes:
        # Full-dim column tile: single contraction step (no dim split).
        tile_k = dim
        if lane_q is None:
            tile_n = n
        else:
            n_cap = max(lane_q, _round_down(n, lane_q))              # never exceed n
            by_budget = max(lane_q, _round_down(budget_bytes // (2 * dim * bpe), lane_q))
            by_target = max(lane_q, _round_down(_TARGET_X_TILE_BYTES // (dim * bpe), lane_q))
            tile_n = min(by_budget, by_target, n_cap)
            if n >= _MIN_PARALLEL_STEPS * lane_q:
                # Keep at least ~4 grid steps on the parallel axis (v7x megacore).
                tile_n = min(tile_n,
                             max(lane_q, _round_up(pl.cdiv(n, _MIN_PARALLEL_STEPS), lane_q)))
    else:
        # dim too large for a full-dim tile under the budget: split the contraction axis.
        if lane_q is None:
            tile_n = n
        else:
            tile_n = min(512, max(lane_q, _round_down(n, lane_q)))
        tile_k = _round_down(budget_bytes // (2 * tile_n * bpe), 128)
        tile_k = max(128, min(tile_k, _round_down(dim, 128)))

    n_steps = pl.cdiv(n, tile_n)
    k_steps = pl.cdiv(dim, tile_k)
    tile_bytes = tile_k * tile_n * bpe
    n_buffers = 3 if (tile_bytes <= _TRIPLE_BUFFER_MAX_TILE_BYTES
                      and n_steps * k_steps >= 3) else 2
    return tile_k, tile_n, n_buffers


def _x_block_spec(tile_k, tile_n, n_buffers):
    index_map = lambda i, k: (k, i)
    if n_buffers > 2:
        try:
            return pl.BlockSpec((tile_k, tile_n), index_map,
                                pipeline_mode=pl.Buffered(n_buffers))
        except TypeError:
            pass  # older signature without pipeline_mode: default double buffering
    return pl.BlockSpec((tile_k, tile_n), index_map)


def _make_kernel(dim, tile_k, tile_n, k_steps):
    """GEMV kernel: accumulate w_tile @ x_tile into the resident (1, tile_n) output."""
    rem = dim % tile_k  # 0 when the contraction axis divides evenly (incl. no split)

    def kernel(x_ref, w_ref, o_ref):
        k = pl.program_id(1)

        @pl.when(k == 0)
        def _init():
            o_ref[...] = jnp.zeros_like(o_ref)

        if rem == 0:
            o_ref[...] += jnp.dot(w_ref[...], x_ref[...],
                                  preferred_element_type=jnp.float32)
        else:
            is_last = k == (k_steps - 1)

            @pl.when(jnp.logical_not(is_last))
            def _full():
                o_ref[...] += jnp.dot(w_ref[...], x_ref[...],
                                      preferred_element_type=jnp.float32)

            @pl.when(is_last)
            def _ragged():
                # Zero the rows/lanes beyond `dim` in the clipped edge block so OOB
                # garbage (possibly NaN) cannot contaminate the accumulation.
                lane = jax.lax.broadcasted_iota(jnp.int32, (1, tile_k), 1)
                row = jax.lax.broadcasted_iota(jnp.int32, (tile_k, tile_n), 0)
                w = jnp.where(lane < rem, w_ref[...], 0.0)
                x = jnp.where(row < rem, x_ref[...], 0.0)
                o_ref[...] += jnp.dot(w, x, preferred_element_type=jnp.float32)

    return kernel


def linear_model_forward(x, w):
    """x: (dim, N) float32, w: (1, dim) float32 -> (N, 1) float32  ==  (w @ x).T"""
    dim, n = x.shape
    budget, vmem_limit = _vmem_budget_and_limit()
    tile_k, tile_n, n_buf = _pick_tiles(dim, n, budget)

    n_steps = pl.cdiv(n, tile_n)
    k_steps = pl.cdiv(dim, tile_k)

    kernel = _make_kernel(dim, tile_k, tile_n, k_steps)

    cost = pl.CostEstimate(flops=2 * dim * n,
                           transcendentals=0,
                           bytes_accessed=4 * (dim * n + dim + n))

    out = pl.pallas_call(
        kernel,
        out_shape=jax.ShapeDtypeStruct((1, n), jnp.float32),   # no padding: ragged edges clipped
        grid=(n_steps, k_steps),                                # reduction axis last
        in_specs=[
            _x_block_spec(tile_k, tile_n, n_buf),               # stream x over (k, i)
            pl.BlockSpec((1, tile_k), lambda i, k: (0, k)),      # w tile (VMEM-resident if k_steps==1)
        ],
        out_specs=pl.BlockSpec((1, tile_n), lambda i, k: (0, i)),  # lane-dense, resident across k
        compiler_params=pltpu.CompilerParams(
            dimension_semantics=("parallel", "arbitrary"),
            vmem_limit_bytes=vmem_limit,
        ),
        cost_estimate=cost,
    )(x, w)

    # (1, n) -> (n, 1): same row-major data order, reshape is a no-op (unlike .T).
    return out.reshape(n, 1)


if __name__ == "__main__":
    dim = 32   # input features of nn.Linear(dim, 1)
    n = 8      # number of "samples" (columns of x before the transpose)

    key = jax.random.PRNGKey(0)
    kx, kw = jax.random.split(key)

    # Input x has shape (dim, N); forward does x.t() -> (N, dim)
    x = jax.random.normal(kx, (dim, n), dtype=jnp.float32)

    # Deterministic init matching nn.Linear default: Uniform(-k, k), k = 1/sqrt(dim)
    k = 1.0 / np.sqrt(dim)
    w = jax.random.uniform(kw, (1, dim), dtype=jnp.float32, minval=-k, maxval=k)

    out = linear_model_forward(x, w)
    out = jax.block_until_ready(out)

    # Reference check in plain JAX (same math as the PyTorch forward)
    ref = jnp.dot(x.T, w.T)
    np.testing.assert_allclose(np.asarray(out), np.asarray(ref), rtol=1e-5, atol=1e-5)
    assert out.shape == (n, 1)

    print("KERNEL_OK")
</pallas_src>

<mosaic_0001>
module attributes {stable_mosaic.version = 11 : i64} {
  func.func @kernel(%arg0: i32, %arg1: i32, %arg2: memref<32x8xf32, #tpu.memory_space<vmem>>, %arg3: memref<1x32xf32, #tpu.memory_space<vmem>>, %arg4: memref<1x8xf32, #tpu.memory_space<vmem>>) attributes {dimension_semantics = [#tpu.dimension_semantics<parallel>, #tpu.dimension_semantics<arbitrary>], iteration_bounds = array<i64: 1, 1>, scalar_prefetch = 0 : i64, scratch_operands = 0 : i64, tpu.core_type = #tpu.core_type<tc>, window_params = [{transform_indices = @transform_0, window_bounds = array<i64: 32, 8>}, {transform_indices = @transform_1, window_bounds = array<i64: 1, 32>}, {transform_indices = @transform_2, window_bounds = array<i64: 1, 8>}]} {
    %c0_i32 = arith.constant 0 : i32
    %0 = arith.cmpi eq, %arg1, %c0_i32 : i32
    %1 = arith.extui %0 : i1 to i32
    %c0_i32_0 = arith.constant 0 : i32
    %2 = arith.cmpi ne, %1, %c0_i32_0 : i32
    scf.if %2 {
      %cst_8 = arith.constant 0.000000e+00 : f32
      %9 = vector.broadcast %cst_8 : f32 to vector<1x8xf32>
      %c0_9 = arith.constant 0 : index
      %c0_10 = arith.constant 0 : index
      %10 = vector.load %arg4[%c0_9, %c0_10] : memref<1x8xf32, #tpu.memory_space<vmem>>, vector<1x8xf32>
      tpu.vector_store %arg4[%c0_9, %c0_10], %9 {strides = array<i32>} : memref<1x8xf32, #tpu.memory_space<vmem>>, vector<1x8xf32>,
    } else {
    }
    %c0 = arith.constant 0 : index
    %c0_1 = arith.constant 0 : index
    %3 = vector.load %arg4[%c0, %c0_1] : memref<1x8xf32, #tpu.memory_space<vmem>>, vector<1x8xf32>
    %c0_2 = arith.constant 0 : index
    %c0_3 = arith.constant 0 : index
    %4 = vector.load %arg3[%c0_2, %c0_3] : memref<1x32xf32, #tpu.memory_space<vmem>>, vector<1x32xf32>
    %c0_4 = arith.constant 0 : index
    %c0_5 = arith.constant 0 : index
    %5 = vector.load %arg2[%c0_4, %c0_5] : memref<32x8xf32, #tpu.memory_space<vmem>>, vector<32x8xf32>
    %cst = arith.constant dense<0.000000e+00> : vector<1x8xf32>
    %6 = tpu.matmul %4, %5, %cst {dimension_numbers = #tpu.dot_dimension_numbers<[1], [0], [0], [1], [0, 0, 1, 1], [], []>} : vector<1x32xf32>, vector<32x8xf32>, vector<1x8xf32> -> vector<1x8xf32>
    %7 = arith.addf %3, %6 : vector<1x8xf32>
    %c0_6 = arith.constant 0 : index
    %c0_7 = arith.constant 0 : index
    %8 = vector.load %arg4[%c0_6, %c0_7] : memref<1x8xf32, #tpu.memory_space<vmem>>, vector<1x8xf32>
    tpu.vector_store %arg4[%c0_6, %c0_7], %7 {strides = array<i32>} : memref<1x8xf32, #tpu.memory_space<vmem>>, vector<1x8xf32>,
    return
  }
  func.func @transform_0(%arg0: i32, %arg1: i32) -> (i32, i32) {
    %c0_i32 = arith.constant 0 : i32
    return %arg1, %arg0 : i32, i32
  }
  func.func @transform_1(%arg0: i32, %arg1: i32) -> (i32, i32) {
    %c0_i32 = arith.constant 0 : i32
    %c0_i32_0 = arith.constant 0 : i32
    return %c0_i32, %arg1 : i32, i32
  }
  func.func @transform_2(%arg0: i32, %arg1: i32) -> (i32, i32) {
    %c0_i32 = arith.constant 0 : i32
    %c0_i32_0 = arith.constant 0 : i32
    return %c0_i32, %arg0 : i32, i32
  }
}

</mosaic_0001>

<llo_original>
// kernel: tpu_custom_call.1
$region0: #{tpu_custom_call.1}
  #allocation0 [shape = 'u32[]', space=smem, size = 0x4, offset = 0x4, fixed_abs, tag = 'smem constant byte address 0x4 - core index']
  #allocation1 [shape = 'u32[72,128]{1,0:T(1,128)}', space=vmem, size = 0x9000, scoped, tag = 'internal scratch']
  %s0 = inlined_call_operand.vmem [shape: f32[32,8], index: 0, kind: input, shape index: {}]
  %s1 = inlined_call_operand.vmem [shape: f32[1,32], index: 1, kind: input, shape index: {}]
  %s2 = inlined_call_operand.hbm [shape: f32[1,8], index: 2, kind: output, shape index: {}]
  %s3 = sld [smem:[#allocation0]]
  $region22: #{tpu_custom_call.1} parent=0
    _
  %s5 = ssub.s32 1, %s3
  %s6 = scalar_select 0, %s5, %s3
  $region1: #{tpu_custom_call.1} parent=0
    #allocation2 [shape = 'u8[512]{0}', space=vmem, size = 0x400, scoped, tag = 'output window, operand 0, single buffered']
    #allocation3 [shape = 's32[1]{0}', space=sflag, size = 0x4, scoped, tag = 'scoped memory for tpu_custom_call.1']
    %7 = vsyncpa [#allocation3], 0
    // Predicated region
    $region2: #{tpu_custom_call.1} parent=1 // pred_check
      _
    $region3: #{tpu_custom_call.1} parent=1 // pred_check_branch
      %9 = sbr.rel (0) target = $region5
    $region4: #{tpu_custom_call.1} parent=1 // pred_region
      _
    $region5: #{tpu_custom_call.1} parent=1 // pred_fallthru
      _
    // Predicated region
    $region6: #{tpu_custom_call.1} parent=1 // pred_check
      _
    $region7: #{tpu_custom_call.1} parent=1 // pred_check_branch
      %11 = sbr.rel (0) target = $region9
    $region8: #{tpu_custom_call.1} parent=1 // pred_region
      _
    $region9: #{tpu_custom_call.1} parent=1 // pred_fallthru
      _
    %p12 = scmp.eq.s32.totalorder 0, 0
    // Predicated region
    $region10: #{tpu_custom_call.1} parent=1 // pred_check
      %p13 = pneg %p12
    $region11: #{tpu_custom_call.1} parent=1 // pred_check_branch
      %15 = sbr.rel (%p13) target = $region13
    $region12: #{tpu_custom_call.1} parent=1 // pred_region
      %vm16 = vcmask 57344
      %17 = vst.msk [vmem:[#allocation2] sm:$0x1] %vm16, 0.0
    $region13: #{tpu_custom_call.1} parent=1 // pred_fallthru
      _
    %v18 = vld [vmem:[#allocation2] sm:$0x1]
    %v19 = vld [vmem:[%s1] sm:$0x1]
    %v20 = vld [vmem:[%s0] sm:$0xff]
    %v21 = vld [vmem:[%s0 + $0x8] sm:$0xff]
    %v22 = vld [vmem:[%s0 + $0x10] sm:$0xff]
    %v23 = vld [vmem:[%s0 + $0x18] sm:$0xff]
    %vm24 = vcmask 261120
    %v26 = vsel %vm24, %v19, 0
    %28 = vmatpush.msra.mxu0 0.0
    %29 = vmatpush.msra.mxu0 0.0
    %30 = vmatpush.msra.mxu0 0.0
    %31 = vmatpush.msra.mxu0 0.0
    %32 = vmatpush.msra.mxu0 0.0
    %33 = vmatpush.msra.mxu0 0.0
    %34 = vmatpush.msra.mxu0 0.0
    %35 = vmatpush.msra.mxu0 0.0
    %36 = vmatpush.msra.mxu0 0.0
    %37 = vmatpush.msra.mxu0 0.0
    %38 = vmatpush.msra.mxu0 0.0
    %39 = vmatpush.msra.mxu0 0.0
    %40 = vmatpush.msra.mxu0 %v23
    %41 = vmatpush.msra.mxu0 %v22
    %42 = vmatpush.msra.mxu0 %v21
    %43 = vmatpush.msra.mxu0 %v20
    %44 = vmatmul.f32.gmra.mxu0 %v26
    %v45 = vpop.f32.mrf.mxu0
    %v46 = vadd.f32 0.0, %v45
    %47 = vdwg.mxu0
    %v48 = vadd.f32 %v18, %v46
    %vm49 = vcmask 57344
    %50 = vst.msk [vmem:[#allocation2] sm:$0x1] %vm49, %v48
    // Predicated region
    $region14: #{tpu_custom_call.1} parent=1 // pred_check
      _
    $region15: #{tpu_custom_call.1} parent=1 // pred_check_branch
      %52 = sbr.rel (0) target = $region17
    $region16: #{tpu_custom_call.1} parent=1 // pred_region
      %54 = vsyncadd [#allocation3], 0
      %s56 = sshll.u32 [#allocation2], 4
      %s57 = int_to_ptr.vmem [resolvable:$true] %s56
      %s58 = sshll.u32 %s2, 4
      %s59 = int_to_ptr.hbm [resolvable:$true] %s58
      %61 = dma.vmem_to_hbm [thread:$0]  %s57, 16, %s59, [#allocation3]
    $region17: #{tpu_custom_call.1} parent=1 // pred_fallthru
      _
    // Predicated region
    $region18: #{tpu_custom_call.1} parent=1 // pred_check
      _
    $region19: #{tpu_custom_call.1} parent=1 // pred_check_branch
      %63 = sbr.rel (0) target = $region21
    $region20: #{tpu_custom_call.1} parent=1 // pred_region
      %65 = dma.done [#allocation3], 16
    $region21: #{tpu_custom_call.1} parent=1 // pred_fallthru
      _
    %66 = vsyncpa [#allocation3], 1

</llo_original>
